<compile_context>
chip_gen: v6e
topology: v6e:2x2x1
jax: 0.10.0
libtpu: 0.0.40
codegen_flags: <defaults>
</compile_context>

<pallas_src>
import numpy as np
import jax
import jax.numpy as jnp
from jax.experimental import pallas as pl
from jax.experimental.pallas import tpu as pltpu

# torchvision rgb_to_grayscale coefficients (Grayscale(3) replicates to 3 ch).
_GRAY_W = np.array([0.2989, 0.587, 0.114], dtype=np.float32)


def _adaptive_pool_weights(out_len, size, offset, total_len):
    """Rows = output index, cols = full-image coordinate. Crop fused in."""
    P = np.zeros((out_len, total_len), dtype=np.float32)
    for o in range(out_len):
        s = (o * size) // out_len
        e = -((-(o + 1) * size) // out_len)  # ceil((o+1)*size/out_len)
        P[o, offset + s: offset + e] = 1.0 / float(e - s)
    return P


def _make_cutout_kernel(C, H, gray_w):
    """Kernel factory; C, H and gray weights are compile-time constants."""

    def kernel(x_ref, py_ref, pxT_ref, flags_ref, o_ref):
        # x_ref    : (1, C*H, W)      VMEM, compute dtype — resident across cutouts
        # py_ref   : (1, Sp, H)       VMEM, compute dtype — row crop+pool matrix
        # pxT_ref  : (1, W, Sp)       VMEM, compute dtype — col crop+pool matrix (transposed)
        # flags_ref: (n_cut,) int32   SMEM — 1 => grayscale this cutout
        # o_ref    : (1, C, Sp, Sp)   output block at row n*B + b
        n = pl.program_id(1)

        x2 = x_ref[0]      # (C*H, W)
        pxT = pxT_ref[0]   # (W, Sp)
        py = py_ref[0]     # (Sp, H)

        # Stage 1: one fused MXU matmul over all channels (W contraction).
        t = jnp.dot(x2, pxT, preferred_element_type=jnp.float32)   # (C*H, Sp) f32
        t = t.astype(x2.dtype)                                      # feed MXU in compute dtype

        # Stage 2: per-channel H contraction (C is small and static).
        pooled = [
            jnp.dot(py, t[c * H:(c + 1) * H, :],
                    preferred_element_type=jnp.float32)             # (Sp, Sp) f32
            for c in range(C)
        ]

        is_gray = flags_ref[n] != 0

        @pl.when(is_gray)
        def _():
            g = pooled[0] * gray_w[0]
            for c in range(1, C):
                g = g + pooled[c] * gray_w[c]
            g = g.astype(o_ref.dtype)
            for d in range(C):
                o_ref[0, d] = g

        @pl.when(jnp.logical_not(is_gray))
        def _():
            for d in range(C):
                o_ref[0, d] = pooled[d].astype(o_ref.dtype)

    return kernel


def _key_to_seed(key):
    """Derive a host-side numpy seed from a JAX key without per-cut syncs."""
    try:
        kd = np.asarray(jax.random.key_data(key))
    except Exception:
        kd = np.asarray(key)
    return int(np.uint64(kd.ravel()[-1]))


class MakeCutoutsPallas:
    def __init__(self, cut_size, cutn, cut_pow=1.0, cutn_whole_portion=0.0,
                 cutn_bw_portion=0.2, rotation_fill=(1.0, 1.0, 1.0),
                 compute_dtype=jnp.bfloat16):
        self.cut_size = cut_size
        self.cutn = cutn
        self.cut_pow = cut_pow
        self.cutn_whole_portion = cutn_whole_portion
        self.cutn_bw_portion = cutn_bw_portion
        self.rotation_fill = rotation_fill
        self.compute_dtype = compute_dtype  # MXU operand dtype; accumulation is f32

    def sample_cuts(self, key, sideY, sideX):
        """Host-side deterministic sampling: (size_y, size_x, offy, offx, gray)."""
        max_size = min(sideX, sideY)
        min_size = min(sideX, sideY, self.cut_size)
        if self.cutn == 1:
            return [(sideY, sideX, 0, 0, False)]
        cut_1 = round(self.cutn * (1 - self.cutn_whole_portion))
        cut_2 = self.cutn - cut_1
        if cut_2 > 0:
            # TODO(synk): rotated (expand=True) whole-image cutouts not implemented.
            raise NotImplementedError("cutn_whole_portion > 0 not supported")
        rng = np.random.default_rng(_key_to_seed(key))
        n_gray = int(self.cutn_bw_portion * cut_1)
        cuts = []
        for i in range(cut_1):
            u = float(rng.random())
            size = int((u ** self.cut_pow) * (max_size - min_size) + min_size)
            size = max(1, min(size, max_size))
            offx = int(rng.integers(0, sideX - size + 1))
            offy = int(rng.integers(0, sideY - size + 1))
            cuts.append((size, size, offy, offx, i < n_gray))
        return cuts

    def __call__(self, x, key):
        B, C, H, W = x.shape
        S = self.cut_size
        Sp = ((S + 127) // 128) * 128          # lane/MXU-aligned padded cut size

        cuts = self.sample_cuts(key, H, W)
        n_cut = len(cuts)

        if C != 3 and any(g for (_, _, _, _, g) in cuts):
            raise NotImplementedError("Grayscale(3) requires 3-channel input")
        gray_w = tuple(float(v) for v in _GRAY_W) if C == 3 else tuple([1.0 / C] * C)

        # Host-side parameter setup (glue): padded pool matrices + gray flags.
        Py = np.zeros((n_cut, Sp, H), dtype=np.float32)
        PxT = np.zeros((n_cut, W, Sp), dtype=np.float32)
        flags = np.zeros((n_cut,), dtype=np.int32)
        for i, (sy, sx, oy, ox, g) in enumerate(cuts):
            Py[i, :S, :] = _adaptive_pool_weights(S, sy, oy, H)
            PxT[i, :, :S] = _adaptive_pool_weights(S, sx, ox, W).T
            flags[i] = int(g)

        cdt = self.compute_dtype
        x2 = x.reshape(B, C * H, W).astype(cdt)         # channels fused into rows
        Py_d = jnp.asarray(Py, dtype=cdt)
        PxT_d = jnp.asarray(PxT, dtype=cdt)
        flags_d = jnp.asarray(flags, dtype=jnp.int32)

        kernel = _make_cutout_kernel(C, H, gray_w)

        # VMEM budget estimate (double-buffered blocks + intermediates).
        cb = np.dtype(cdt).itemsize
        ob = np.dtype(x.dtype).itemsize
        est = (2 * (C * H * W * cb + Sp * H * cb + W * Sp * cb + C * Sp * Sp * ob)
               + C * H * Sp * (4 + cb) + C * Sp * Sp * 4)
        vmem_limit = int(min(max(3 * est, 32 * 2 ** 20), 64 * 2 ** 20))

        out_pad = pl.pallas_call(
            kernel,
            out_shape=jax.ShapeDtypeStruct((n_cut * B, C, Sp, Sp), x.dtype),
            grid_spec=pltpu.PrefetchScalarGridSpec(
                num_scalar_prefetch=0,
                grid=(B, n_cut),   # batch outermost -> image tile resident across cutouts
                in_specs=[
                    pl.BlockSpec((1, C * H, W), lambda b, n: (b, 0, 0)),   # x (slow axis only)
                    pl.BlockSpec((1, Sp, H), lambda b, n: (n, 0, 0)),      # Py
                    pl.BlockSpec((1, W, Sp), lambda b, n: (n, 0, 0)),      # PxT
                    pl.BlockSpec(memory_space=pltpu.MemorySpace.SMEM),     # gray flags
                ],
                out_specs=pl.BlockSpec((1, C, Sp, Sp),
                                       lambda b, n: (n * B + b, 0, 0, 0)),
            ),
            compiler_params=pltpu.CompilerParams(
                dimension_semantics=("parallel", "parallel"),
                vmem_limit_bytes=vmem_limit),
        )(x2, Py_d, PxT_d, flags_d)

        # Strip the lane padding (compute was padded with zero pool rows/cols).
        out = out_pad[:, :, :S, :S]
        return out, cuts


def _reference(x_np, cuts, S):
    """Pure numpy reference: crop -> (gray) -> adaptive_avg_pool2d -> concat."""
    B, C, _, _ = x_np.shape
    outs = []
    for (sy, sx, oy, ox, g) in cuts:
        crop = x_np[:, :, oy:oy + sy, ox:ox + sx].astype(np.float64)
        if g:
            gray = np.tensordot(_GRAY_W.astype(np.float64), crop, axes=([0], [1]))
            crop = np.repeat(gray[:, None, :, :], C, axis=1)
        pooled = np.zeros((B, C, S, S), dtype=np.float64)
        for o1 in range(S):
            s1 = (o1 * sy) // S
            e1 = -((-(o1 + 1) * sy) // S)
            for o2 in range(S):
                s2 = (o2 * sx) // S
                e2 = -((-(o2 + 1) * sx) // S)
                pooled[:, :, o1, o2] = crop[:, :, s1:e1, s2:e2].mean(axis=(2, 3))
        outs.append(pooled)
    return np.concatenate(outs, axis=0).astype(np.float32)


if __name__ == "__main__":
    key = jax.random.PRNGKey(0)
    k_data, k_cuts = jax.random.split(key)

    B, C, H, W = 2, 3, 16, 16
    x = jax.random.uniform(k_data, (B, C, H, W), dtype=jnp.float32)

    # Fast path: bf16 MXU operands, f32 accumulation.
    mod = MakeCutoutsPallas(cut_size=8, cutn=4, cut_pow=1.0,
                            cutn_whole_portion=0.0, cutn_bw_portion=0.5)
    out, cuts = mod(x, k_cuts)
    out = jax.block_until_ready(out)
    ref = _reference(np.asarray(x), cuts, mod.cut_size)
    assert out.shape == (mod.cutn * B, C, mod.cut_size, mod.cut_size), out.shape
    np.testing.assert_allclose(np.asarray(out), ref, rtol=5e-2, atol=5e-2)

    # Full-precision path: tight numerical check of the same kernel structure.
    mod32 = MakeCutoutsPallas(cut_size=8, cutn=4, cut_pow=1.0,
                              cutn_whole_portion=0.0, cutn_bw_portion=0.5,
                              compute_dtype=jnp.float32)
    out32, cuts32 = mod32(x, k_cuts)
    out32 = jax.block_until_ready(out32)
    ref32 = _reference(np.asarray(x), cuts32, mod32.cut_size)
    np.testing.assert_allclose(np.asarray(out32), ref32, rtol=1e-4, atol=1e-5)

    print("KERNEL_OK")
</pallas_src>

<mosaic_0001>
module attributes {stable_mosaic.version = 11 : i64} {
  func.func @kernel(%arg0: i32, %arg1: i32, %arg2: memref<1x48x16xbf16, #tpu.memory_space<vmem>>, %arg3: memref<1x128x16xbf16, #tpu.memory_space<vmem>>, %arg4: memref<1x16x128xbf16, #tpu.memory_space<vmem>>, %arg5: memref<4xi32, #tpu.memory_space<smem>>, %arg6: memref<1x3x128x128xf32, #tpu.memory_space<vmem>>) attributes {dimension_semantics = [#tpu.dimension_semantics<parallel>, #tpu.dimension_semantics<parallel>], iteration_bounds = array<i64: 2, 4>, scalar_prefetch = 0 : i64, scratch_operands = 0 : i64, tpu.core_type = #tpu.core_type<tc>, window_params = [{transform_indices = @transform_0, window_bounds = array<i64: 1, 48, 16>}, {transform_indices = @transform_1, window_bounds = array<i64: 1, 128, 16>}, {transform_indices = @transform_2, window_bounds = array<i64: 1, 16, 128>}, {transform_indices = @transform_3, window_bounds = array<i64: 4>}, {transform_indices = @transform_4, window_bounds = array<i64: 1, 3, 128, 128>}]} {
    %c0 = arith.constant 0 : index
    %c0_0 = arith.constant 0 : index
    %c0_1 = arith.constant 0 : index
    %0 = vector.load %arg2[%c0, %c0_0, %c0_1] : memref<1x48x16xbf16, #tpu.memory_space<vmem>>, vector<1x48x16xbf16>
    %1 = vector.shape_cast %0 : vector<1x48x16xbf16> to vector<48x16xbf16>
    %c0_2 = arith.constant 0 : index
    %c0_3 = arith.constant 0 : index
    %c0_4 = arith.constant 0 : index
    %2 = vector.load %arg4[%c0_2, %c0_3, %c0_4] : memref<1x16x128xbf16, #tpu.memory_space<vmem>>, vector<1x16x128xbf16>
    %3 = vector.shape_cast %2 : vector<1x16x128xbf16> to vector<16x128xbf16>
    %c0_5 = arith.constant 0 : index
    %c0_6 = arith.constant 0 : index
    %c0_7 = arith.constant 0 : index
    %4 = vector.load %arg3[%c0_5, %c0_6, %c0_7] : memref<1x128x16xbf16, #tpu.memory_space<vmem>>, vector<1x128x16xbf16>
    %5 = vector.shape_cast %4 : vector<1x128x16xbf16> to vector<128x16xbf16>
    %cst = arith.constant dense<0.000000e+00> : vector<48x128xf32>
    %6 = tpu.matmul %1, %3, %cst {dimension_numbers = #tpu.dot_dimension_numbers<[1], [0], [0], [1], [0, 0, 1, 1], [], []>} : vector<48x16xbf16>, vector<16x128xbf16>, vector<48x128xf32> -> vector<48x128xf32>
    %7 = arith.truncf %6 : vector<48x128xf32> to vector<48x128xbf16>
    %8 = vector.extract_strided_slice %7 {offsets = [0, 0], sizes = [16, 128], strides = [1, 1]} : vector<48x128xbf16> to vector<16x128xbf16>
    %cst_8 = arith.constant dense<0.000000e+00> : vector<128x128xf32>
    %9 = tpu.matmul %5, %8, %cst_8 {dimension_numbers = #tpu.dot_dimension_numbers<[1], [0], [0], [1], [0, 0, 1, 1], [], []>} : vector<128x16xbf16>, vector<16x128xbf16>, vector<128x128xf32> -> vector<128x128xf32>
    %10 = vector.extract_strided_slice %7 {offsets = [16, 0], sizes = [16, 128], strides = [1, 1]} : vector<48x128xbf16> to vector<16x128xbf16>
    %cst_9 = arith.constant dense<0.000000e+00> : vector<128x128xf32>
    %11 = tpu.matmul %5, %10, %cst_9 {dimension_numbers = #tpu.dot_dimension_numbers<[1], [0], [0], [1], [0, 0, 1, 1], [], []>} : vector<128x16xbf16>, vector<16x128xbf16>, vector<128x128xf32> -> vector<128x128xf32>
    %12 = vector.extract_strided_slice %7 {offsets = [32, 0], sizes = [16, 128], strides = [1, 1]} : vector<48x128xbf16> to vector<16x128xbf16>
    %cst_10 = arith.constant dense<0.000000e+00> : vector<128x128xf32>
    %13 = tpu.matmul %5, %12, %cst_10 {dimension_numbers = #tpu.dot_dimension_numbers<[1], [0], [0], [1], [0, 0, 1, 1], [], []>} : vector<128x16xbf16>, vector<16x128xbf16>, vector<128x128xf32> -> vector<128x128xf32>
    %14 = arith.index_cast %arg1 : i32 to index
    %15 = memref.load %arg5[%14] : memref<4xi32, #tpu.memory_space<smem>>
    %c0_i32 = arith.constant 0 : i32
    %16 = arith.cmpi ne, %15, %c0_i32 : i32
    %17 = arith.extui %16 : i1 to i32
    %c0_i32_11 = arith.constant 0 : i32
    %18 = arith.cmpi ne, %17, %c0_i32_11 : i32
    scf.if %18 {
      %cst_13 = arith.constant 2.989000e-01 : f32
      %22 = vector.broadcast %cst_13 : f32 to vector<128x128xf32>
      %23 = arith.mulf %9, %22 : vector<128x128xf32>
      %cst_14 = arith.constant 5.870000e-01 : f32
      %24 = vector.broadcast %cst_14 : f32 to vector<128x128xf32>
      %25 = arith.mulf %11, %24 : vector<128x128xf32>
      %26 = arith.addf %23, %25 : vector<128x128xf32>
      %cst_15 = arith.constant 1.140000e-01 : f32
      %27 = vector.broadcast %cst_15 : f32 to vector<128x128xf32>
      %28 = arith.mulf %13, %27 : vector<128x128xf32>
      %29 = arith.addf %26, %28 : vector<128x128xf32>
      %c0_16 = arith.constant 0 : index
      %c0_17 = arith.constant 0 : index
      %c0_18 = arith.constant 0 : index
      %c0_19 = arith.constant 0 : index
      %30 = vector.load %arg6[%c0_16, %c0_17, %c0_18, %c0_19] : memref<1x3x128x128xf32, #tpu.memory_space<vmem>>, vector<1x1x128x128xf32>
      %31 = vector.shape_cast %30 : vector<1x1x128x128xf32> to vector<128x128xf32>
      %32 = vector.shape_cast %29 : vector<128x128xf32> to vector<1x1x128x128xf32>
      tpu.vector_store %arg6[%c0_16, %c0_17, %c0_18, %c0_19], %32 {strides = array<i32>} : memref<1x3x128x128xf32, #tpu.memory_space<vmem>>, vector<1x1x128x128xf32>,
      %c0_20 = arith.constant 0 : index
      %c1 = arith.constant 1 : index
      %c0_21 = arith.constant 0 : index
      %c0_22 = arith.constant 0 : index
      %33 = vector.load %arg6[%c0_20, %c1, %c0_21, %c0_22] : memref<1x3x128x128xf32, #tpu.memory_space<vmem>>, vector<1x1x128x128xf32>
      %34 = vector.shape_cast %33 : vector<1x1x128x128xf32> to vector<128x128xf32>
      %35 = vector.shape_cast %29 : vector<128x128xf32> to vector<1x1x128x128xf32>
      tpu.vector_store %arg6[%c0_20, %c1, %c0_21, %c0_22], %35 {strides = array<i32>} : memref<1x3x128x128xf32, #tpu.memory_space<vmem>>, vector<1x1x128x128xf32>,
      %c0_23 = arith.constant 0 : index
      %c2 = arith.constant 2 : index
      %c0_24 = arith.constant 0 : index
      %c0_25 = arith.constant 0 : index
      %36 = vector.load %arg6[%c0_23, %c2, %c0_24, %c0_25] : memref<1x3x128x128xf32, #tpu.memory_space<vmem>>, vector<1x1x128x128xf32>
      %37 = vector.shape_cast %36 : vector<1x1x128x128xf32> to vector<128x128xf32>
      %38 = vector.shape_cast %29 : vector<128x128xf32> to vector<1x1x128x128xf32>
      tpu.vector_store %arg6[%c0_23, %c2, %c0_24, %c0_25], %38 {strides = array<i32>} : memref<1x3x128x128xf32, #tpu.memory_space<vmem>>, vector<1x1x128x128xf32>,
    } else {
    }
    %true = arith.constant true
    %19 = arith.xori %16, %true : i1
    %20 = arith.extui %19 : i1 to i32
    %c0_i32_12 = arith.constant 0 : i32
    %21 = arith.cmpi ne, %20, %c0_i32_12 : i32
    scf.if %21 {
      %c0_13 = arith.constant 0 : index
      %c0_14 = arith.constant 0 : index
      %c0_15 = arith.constant 0 : index
      %c0_16 = arith.constant 0 : index
      %22 = vector.load %arg6[%c0_13, %c0_14, %c0_15, %c0_16] : memref<1x3x128x128xf32, #tpu.memory_space<vmem>>, vector<1x1x128x128xf32>
      %23 = vector.shape_cast %22 : vector<1x1x128x128xf32> to vector<128x128xf32>
      %24 = vector.shape_cast %9 : vector<128x128xf32> to vector<1x1x128x128xf32>
      tpu.vector_store %arg6[%c0_13, %c0_14, %c0_15, %c0_16], %24 {strides = array<i32>} : memref<1x3x128x128xf32, #tpu.memory_space<vmem>>, vector<1x1x128x128xf32>,
      %c0_17 = arith.constant 0 : index
      %c1 = arith.constant 1 : index
      %c0_18 = arith.constant 0 : index
      %c0_19 = arith.constant 0 : index
      %25 = vector.load %arg6[%c0_17, %c1, %c0_18, %c0_19] : memref<1x3x128x128xf32, #tpu.memory_space<vmem>>, vector<1x1x128x128xf32>
      %26 = vector.shape_cast %25 : vector<1x1x128x128xf32> to vector<128x128xf32>
      %27 = vector.shape_cast %11 : vector<128x128xf32> to vector<1x1x128x128xf32>
      tpu.vector_store %arg6[%c0_17, %c1, %c0_18, %c0_19], %27 {strides = array<i32>} : memref<1x3x128x128xf32, #tpu.memory_space<vmem>>, vector<1x1x128x128xf32>,
      %c0_20 = arith.constant 0 : index
      %c2 = arith.constant 2 : index
      %c0_21 = arith.constant 0 : index
      %c0_22 = arith.constant 0 : index
      %28 = vector.load %arg6[%c0_20, %c2, %c0_21, %c0_22] : memref<1x3x128x128xf32, #tpu.memory_space<vmem>>, vector<1x1x128x128xf32>
      %29 = vector.shape_cast %28 : vector<1x1x128x128xf32> to vector<128x128xf32>
      %30 = vector.shape_cast %13 : vector<128x128xf32> to vector<1x1x128x128xf32>
      tpu.vector_store %arg6[%c0_20, %c2, %c0_21, %c0_22], %30 {strides = array<i32>} : memref<1x3x128x128xf32, #tpu.memory_space<vmem>>, vector<1x1x128x128xf32>,
    } else {
    }
    return
  }
  func.func @transform_0(%arg0: i32, %arg1: i32) -> (i32, i32, i32) {
    %c0_i32 = arith.constant 0 : i32
    %c0_i32_0 = arith.constant 0 : i32
    %c0_i32_1 = arith.constant 0 : i32
    return %arg0, %c0_i32, %c0_i32_0 : i32, i32, i32
  }
  func.func @transform_1(%arg0: i32, %arg1: i32) -> (i32, i32, i32) {
    %c0_i32 = arith.constant 0 : i32
    %c0_i32_0 = arith.constant 0 : i32
    %c0_i32_1 = arith.constant 0 : i32
    return %arg1, %c0_i32, %c0_i32_0 : i32, i32, i32
  }
  func.func @transform_2(%arg0: i32, %arg1: i32) -> (i32, i32, i32) {
    %c0_i32 = arith.constant 0 : i32
    %c0_i32_0 = arith.constant 0 : i32
    %c0_i32_1 = arith.constant 0 : i32
    return %arg1, %c0_i32, %c0_i32_0 : i32, i32, i32
  }
  func.func @transform_3(%arg0: i32, %arg1: i32) -> i32 {
    %c0_i32 = arith.constant 0 : i32
    %c0_i32_0 = arith.constant 0 : i32
    return %c0_i32 : i32
  }
  func.func @transform_4(%arg0: i32, %arg1: i32) -> (i32, i32, i32, i32) {
    %c2_i32 = arith.constant 2 : i32
    %0 = arith.muli %arg1, %c2_i32 : i32
    %1 = arith.addi %0, %arg0 : i32
    %c0_i32 = arith.constant 0 : i32
    %c0_i32_0 = arith.constant 0 : i32
    %c0_i32_1 = arith.constant 0 : i32
    %c0_i32_2 = arith.constant 0 : i32
    return %1, %c0_i32, %c0_i32_0, %c0_i32_1 : i32, i32, i32, i32
  }
}

</mosaic_0001>

<llo_original>
// kernel: tpu_custom_call.1
$region0: #{tpu_custom_call.1}
  #allocation0 [shape = 'u32[]', space=smem, size = 0x4, offset = 0x4, fixed_abs, tag = 'smem constant byte address 0x4 - core index']
  #allocation1 [shape = 'u32[144,128]{1,0:T(1,128)}', space=vmem, size = 0x12000, scoped, tag = 'internal scratch']
  %s0 = inlined_call_operand.vmem [shape: bf16[2,48,16], index: 0, kind: input, shape index: {}]
  %s1 = inlined_call_operand.vmem [shape: bf16[4,128,16], index: 1, kind: input, shape index: {}]
  %s2 = inlined_call_operand.hbm [shape: bf16[4,16,128], index: 2, kind: input, shape index: {}]
  %s3 = inlined_call_operand.hbm [shape: s32[4], index: 3, kind: input, shape index: {}]
  %s4 = inlined_call_operand.hbm [shape: f32[8,3,128,128], index: 4, kind: output, shape index: {}]
  %s5 = sld [smem:[#allocation0]]
  $region65: #{tpu_custom_call.1} parent=0
    _
  %s7 = ssub.s32 1, %s5
  %s8 = scalar_select 0, %s7, %s5
  $region1: #{tpu_custom_call.1} parent=0
    #allocation2 [shape = 'u8[8192]{0}', space=vmem, size = 0x2000, scoped, tag = 'input window, operand 2']
    #allocation3 [shape = 's32[2]{0}', space=sflag, size = 0x8, scoped, tag = 'scoped memory for tpu_custom_call.1']
    #allocation4 [shape = 's32[2]{0}', space=sflag, size = 0x8, scoped, tag = 'scoped memory for tpu_custom_call.1']
    #allocation5 [shape = 's32[2]{0}', space=sflag, size = 0x8, scoped, tag = 'scoped memory for tpu_custom_call.1']
    #allocation6 [shape = 'u8[512]{0}', space=smem, size = 0x200, scoped, tag = 'input window, operand 3, single buffered']
    #allocation7 [shape = 'u8[393216]{0}', space=vmem, size = 0x60000, scoped, tag = 'output window, operand 0']
    %9 = vsyncpa [#allocation3], 0
    %s10 = scalar_lea.sflag [#allocation3], 1
    %11 = vsyncpa %s10, 0
    %12 = vsyncpa [#allocation5], 0
    %13 = vsyncpa [#allocation4], 0
    %s14 = scalar_lea.sflag [#allocation4], 1
    %15 = vsyncpa %s14, 0
    loop: start=0, step=1, limit=10
    $region2: #{tpu_custom_call.1} parent=1 // loop_pre_header
      _
    $region3: #{tpu_custom_call.1} parent=1 // loop_header
      %s17 = sphi 0, %s21
      %p18 = scmp.ge.s32.totalorder %s17, 10
      %s24 = sphi 0, %s36
      %s25 = sphi 0, %s32
      %s26 = sphi 0, %s24
      %s27 = sphi 0, %s25
      %s28 = sphi 0, %s26
      %s29 = sphi 0, %s27
      %s39 = sphi 0, %s41
      %s42 = sphi 0, %s39
      %s43 = sphi 0, %s42
      %s59 = sphi 0, %s43
      %s65 = sphi 0, %s67
      %s68 = sphi 0, %s65
      %s69 = sphi 0, %s68
      %s85 = sphi 0, %s69
      %s91 = sphi 0, %s93
      %s94 = sphi 0, %s91
      %s95 = sphi 0, %s94
      %s111 = sphi 0, %s95
      %s115 = sphi 0, %s115
      %s117 = sphi 0, %s115
      %s118 = sphi 0, %s117
      %s132 = sphi 0, %s118
      %s142 = sphi 0, %s144
      %s145 = sphi 0, %s142
      %s146 = sphi 0, %s145
      %s162 = sphi 0, %s146
    $region4: #{tpu_custom_call.1} parent=1 // loop_header_branch
      %20 = sbr.rel (%p18) target = $region8
    $region5: #{tpu_custom_call.1} parent=1 // loop_body
      %s22 = ssub.s32 %s17, 1
      %s23 = ssub.s32 %s17, 2
      %s30 = sadd.s32 1, %s25
      %p31 = scmp.ge.s32.totalorder %s30, 4
      %s32 = scalar_select %p31, 0, %s30
      %s33 = sadd.s32 1, %s24
      %s34 = scalar_select %p31, %s33, %s24
      %p35 = scmp.ge.s32.totalorder %s34, 2
      %s36 = scalar_select %p35, 0, %s34
      %s37 = ssub.s32 %s24, %s36
      %p38 = scmp.eq.s32.totalorder %s37, 0
      %s40 = sadd.s32 %s39, 1
      %s41 = scalar_select %p38, %s39, %s40
      %p44 = pneg %p38
      %p45 = scmp.eq.s32.totalorder %s17, 7
      %p46 = por %p44, %p45
      %p47 = scmp.ne.s32.totalorder %s39, %s42
      %p48 = scmp.eq.s32.totalorder %s17, 0
      %p49 = por %p47, %p48
      %p50 = scmp.ne.s32.totalorder %s39, %s42
      %p51 = scmp.eq.s32.totalorder %s22, 7
      %p52 = por %p50, %p51
      %p53 = scmp.ne.s32.totalorder %s42, %s43
      %p54 = scmp.eq.s32.totalorder %s22, 0
      %p55 = por %p53, %p54
      %p56 = scmp.ne.s32.totalorder %s42, %s43
      %p57 = scmp.eq.s32.totalorder %s23, 7
      %p58 = por %p56, %p57
      %p60 = scmp.ne.s32.totalorder %s43, %s59
      %p61 = scmp.eq.s32.totalorder %s23, 0
      %p62 = por %p60, %p61
      %s63 = ssub.s32 %s25, %s32
      %p64 = scmp.eq.s32.totalorder %s63, 0
      %s66 = sadd.s32 %s65, 1
      %s67 = scalar_select %p64, %s65, %s66
      %p70 = pneg %p64
      %p71 = scmp.eq.s32.totalorder %s17, 7
      %p72 = por %p70, %p71
      %p73 = scmp.ne.s32.totalorder %s65, %s68
      %p74 = scmp.eq.s32.totalorder %s17, 0
      %p75 = por %p73, %p74
      %p76 = scmp.ne.s32.totalorder %s65, %s68
      %p77 = scmp.eq.s32.totalorder %s22, 7
      %p78 = por %p76, %p77
      %p79 = scmp.ne.s32.totalorder %s68, %s69
      %p80 = scmp.eq.s32.totalorder %s22, 0
      %p81 = por %p79, %p80
      %p82 = scmp.ne.s32.totalorder %s68, %s69
      %p83 = scmp.eq.s32.totalorder %s23, 7
      %p84 = por %p82, %p83
      %p86 = scmp.ne.s32.totalorder %s69, %s85
      %p87 = scmp.eq.s32.totalorder %s23, 0
      %p88 = por %p86, %p87
      %s89 = ssub.s32 %s25, %s32
      %p90 = scmp.eq.s32.totalorder %s89, 0
      %s92 = sadd.s32 %s91, 1
      %s93 = scalar_select %p90, %s91, %s92
      %p96 = pneg %p90
      %p97 = scmp.eq.s32.totalorder %s17, 7
      %p98 = por %p96, %p97
      %p99 = scmp.ne.s32.totalorder %s91, %s94
      %p100 = scmp.eq.s32.totalorder %s17, 0
      %p101 = por %p99, %p100
      %p102 = scmp.ne.s32.totalorder %s91, %s94
      %p103 = scmp.eq.s32.totalorder %s22, 7
      %p104 = por %p102, %p103
      %p105 = scmp.ne.s32.totalorder %s94, %s95
      %p106 = scmp.eq.s32.totalorder %s22, 0
      %p107 = por %p105, %p106
      %p108 = scmp.ne.s32.totalorder %s94, %s95
      %p109 = scmp.eq.s32.totalorder %s23, 7
      %p110 = por %p108, %p109
      %p112 = scmp.ne.s32.totalorder %s95, %s111
      %p113 = scmp.eq.s32.totalorder %s23, 0
      %p114 = por %p112, %p113
      %s116 = sadd.s32 %s115, 1
      %p119 = scmp.eq.s32.totalorder %s17, 7
      %p120 = scmp.ne.s32.totalorder %s115, %s117
      %p121 = scmp.eq.s32.totalorder %s17, 0
      %p122 = por %p120, %p121
      %p123 = scmp.ne.s32.totalorder %s115, %s117
      %p124 = scmp.eq.s32.totalorder %s22, 7
      %p125 = por %p123, %p124
      %p126 = scmp.ne.s32.totalorder %s117, %s118
      %p127 = scmp.eq.s32.totalorder %s22, 0
      %p128 = por %p126, %p127
      %p129 = scmp.ne.s32.totalorder %s117, %s118
      %p130 = scmp.eq.s32.totalorder %s23, 7
      %p131 = por %p129, %p130
      %p133 = scmp.ne.s32.totalorder %s118, %s132
      %p134 = scmp.eq.s32.totalorder %s23, 0
      %p135 = por %p133, %p134
      %s136 = smul.u32 %s25, 2
      %s137 = sadd.s32 %s136, %s24
      %s138 = smul.u32 %s32, 2
      %s139 = sadd.s32 %s138, %s36
      %s140 = ssub.s32 %s137, %s139
      %p141 = scmp.eq.s32.totalorder %s140, 0
      %s143 = sadd.s32 %s142, 1
      %s144 = scalar_select %p141, %s142, %s143
      %p147 = pneg %p141
      %p148 = scmp.eq.s32.totalorder %s17, 7
      %p149 = por %p147, %p148
      %p150 = scmp.ne.s32.totalorder %s142, %s145
      %p151 = scmp.eq.s32.totalorder %s17, 0
      %p152 = por %p150, %p151
      %p153 = scmp.ne.s32.totalorder %s142, %s145
      %p154 = scmp.eq.s32.totalorder %s22, 7
      %p155 = por %p153, %p154
      %p156 = scmp.ne.s32.totalorder %s145, %s146
      %p157 = scmp.eq.s32.totalorder %s22, 0
      %p158 = por %p156, %p157
      %p159 = scmp.ne.s32.totalorder %s145, %s146
      %p160 = scmp.eq.s32.totalorder %s23, 7
      %p161 = por %p159, %p160
      %p163 = scmp.ne.s32.totalorder %s146, %s162
      %p164 = scmp.eq.s32.totalorder %s23, 0
      %p165 = por %p163, %p164
      %p166 = scmp.le.s32.totalorder 1, %s17
      %p167 = scmp.lt.s32.totalorder %s17, 9
      %p168 = pnand %p166, %p167
      %p169 = pneg %p168
      // Predicated region
      $region9: #{tpu_custom_call.1} parent=5 // pred_check
        _
      $region10: #{tpu_custom_call.1} parent=5 // pred_check_branch
        %171 = sbr.rel (%p168) target = $region12
      $region11: #{tpu_custom_call.1} parent=5 // pred_region
        %s172 = ssub.s32 %s17, 1
        // Predicated region
        $region13: #{tpu_custom_call.1} parent=11 // pred_check
          %p173 = pneg %p128
        $region14: #{tpu_custom_call.1} parent=11 // pred_check_branch
          %175 = sbr.rel (%p173) target = $region16
        $region15: #{tpu_custom_call.1} parent=11 // pred_region
          %s177 = ssub.s32 16, 16
          %178 = vsyncadd [#allocation5], %s177
          %181 = dma.hbm_to_smem %s3, 16, [#allocation6], [#allocation5]
        $region16: #{tpu_custom_call.1} parent=11 // pred_fallthru
          _
      $region12: #{tpu_custom_call.1} parent=5 // pred_fallthru
        _
      %p182 = scmp.lt.s32.totalorder %s17, 8
      // Predicated region
      $region17: #{tpu_custom_call.1} parent=5 // pred_check
        %p183 = pneg %p182
      $region18: #{tpu_custom_call.1} parent=5 // pred_check_branch
        %185 = sbr.rel (%p183) target = $region20
      $region19: #{tpu_custom_call.1} parent=5 // pred_region
        // Predicated region
        $region21: #{tpu_custom_call.1} parent=19 // pred_check
          %p186 = pneg %p49
        $region22: #{tpu_custom_call.1} parent=19 // pred_check_branch
          %188 = sbr.rel (%p186) target = $region24
        $region23: #{tpu_custom_call.1} parent=19 // pred_region
          %p189 = scmp.lt.s32.totalorder %s24, 1
          %s190 = scalar_select %p189, %s24, 1
          %s191 = smul.addr %s190, 6
          %s192 = smul.addr %s191, 4
          %s193 = scalar_lea.vmem %s0, %s192
        $region24: #{tpu_custom_call.1} parent=19 // pred_fallthru
          _
        // Predicated region
        $region25: #{tpu_custom_call.1} parent=19 // pred_check
          %p194 = pneg %p75
        $region26: #{tpu_custom_call.1} parent=19 // pred_check_branch
          %196 = sbr.rel (%p194) target = $region28
        $region27: #{tpu_custom_call.1} parent=19 // pred_region
          %p197 = scmp.lt.s32.totalorder %s25, 3
          %s198 = scalar_select %p197, %s25, 3
          %s199 = smul.addr %s198, 16
          %s200 = smul.addr %s199, 4
          %s201 = scalar_lea.vmem %s1, %s200
        $region28: #{tpu_custom_call.1} parent=19 // pred_fallthru
          _
        // Predicated region
        $region29: #{tpu_custom_call.1} parent=19 // pred_check
          %p202 = pneg %p101
        $region30: #{tpu_custom_call.1} parent=19 // pred_check_branch
          %204 = sbr.rel (%p202) target = $region32
        $region31: #{tpu_custom_call.1} parent=19 // pred_region
          %s205 = sand.u32 %s91, 1
          %s206 = scalar_lea.sflag [#allocation3], %s205
          %s207 = sand.u32 %s91, 1
          %s208 = smul.addr %s207, 8
          %s209 = scalar_lea.vmem [#allocation2], %s208
          %s211 = ssub.s32 128, 128
          %212 = vsyncadd %s206, %s211
          %s213 = smul.addr %s25, 2
          %s214 = smul.addr %s213, 64
          %s215 = scalar_lea.hbm %s2, %s214
          %s216 = sshll.u32 %s209, 4
          %s217 = int_to_ptr.vmem [resolvable:$true] %s216
          %222 = dma.hbm_to_vmem [thread:$0]  %s215, 128, %s217, %s206, 64, 64, 4
        $region32: #{tpu_custom_call.1} parent=19 // pred_fallthru
          _
      $region20: #{tpu_custom_call.1} parent=5 // pred_fallthru
        _
      %p223 = scmp.le.s32.totalorder 1, %s17
      %p224 = scmp.lt.s32.totalorder %s17, 9
      %p225 = pnand %p223, %p224
      %p226 = pneg %p225
      // Predicated region
      $region33: #{tpu_custom_call.1} parent=5 // pred_check
        _
      $region34: #{tpu_custom_call.1} parent=5 // pred_check_branch
        %228 = sbr.rel (%p225) target = $region36
      $region35: #{tpu_custom_call.1} parent=5 // pred_region
        %s229 = ssub.s32 %s17, 1
        %s230 = sand.u32 %s94, 1
        %s231 = scalar_lea.sflag [#allocation3], %s230
        %s232 = sand.u32 %s94, 1
        %s233 = smul.addr %s232, 8
        %s234 = scalar_lea.vmem [#allocation2], %s233
        // Predicated region
        $region37: #{tpu_custom_call.1} parent=35 // pred_check
          %p235 = pneg %p107
        $region38: #{tpu_custom_call.1} parent=35 // pred_check_branch
          %237 = sbr.rel (%p235) target = $region40
        $region39: #{tpu_custom_call.1} parent=35 // pred_region
          %238 = dma.done %s231, 128
        $region40: #{tpu_custom_call.1} parent=35 // pred_fallthru
          _
        // Predicated region
        $region41: #{tpu_custom_call.1} parent=35 // pred_check
          %p239 = pneg %p128
        $region42: #{tpu_custom_call.1} parent=35 // pred_check_branch
          %241 = sbr.rel (%p239) target = $region44
        $region43: #{tpu_custom_call.1} parent=35 // pred_region
          %242 = dma.done [#allocation5], 16
        $region44: #{tpu_custom_call.1} parent=35 // pred_fallthru
          _
        %243 = sfence
        %p244 = scmp.lt.s32.totalorder %s26, 1
        %s245 = scalar_select %p244, %s26, 1
        %s246 = smul.addr %s245, 6
        %s247 = smul.addr %s246, 4
        %s248 = scalar_lea.vmem %s0, %s247
        %p249 = pneg %p55
        %p250 = pneg %p52
        %p251 = scmp.lt.s32.totalorder %s27, 3
        %s252 = scalar_select %p251, %s27, 3
        %s253 = smul.addr %s252, 16
        %s254 = smul.addr %s253, 4
        %s255 = scalar_lea.vmem %s1, %s254
        %p256 = pneg %p81
        %p257 = pneg %p78
        %s258 = sand.u32 %s94, 1
        %s259 = scalar_lea.sflag [#allocation3], %s258
        %s260 = sand.u32 %s94, 1
        %s261 = smul.addr %s260, 8
        %s262 = scalar_lea.vmem [#allocation2], %s261
        %p263 = pneg %p107
        %p264 = pneg %p104
        %p265 = pneg %p128
        %p266 = pneg %p125
        %p267 = pneg %p158
        %p268 = pneg %p155
        %s269 = sand.u32 %s145, 1
        %s270 = scalar_lea.sflag [#allocation4], %s269
        %s271 = sand.u32 %s145, 1
        %s272 = smul.addr %s271, 384
        %s273 = scalar_lea.vmem [#allocation7], %s272
        %p274 = scmp.lt.s32.totalorder %s26, 1
        %s275 = scalar_select %p274, %s26, 1
        %s276 = smul.addr %s275, 6
        %s277 = smul.addr %s276, 4
        %s278 = scalar_lea.vmem %s0, %s277
        %p279 = scmp.lt.s32.totalorder %s27, 3
        %s280 = scalar_select %p279, %s27, 3
        %s281 = smul.addr %s280, 16
        %s282 = smul.addr %s281, 4
        %s283 = scalar_lea.vmem %s1, %s282
        %s284 = smul.u32 %s27, 2
        %s285 = sadd.s32 %s284, %s26
        %v287 = vld [vmem:[%s278] sm:$0xf]
        %v288 = vld [vmem:[%s278 + $0x4] sm:$0xf]
        %v289 = vld [vmem:[%s278 + $0x8] sm:$0xf]
        %v290 = vld [vmem:[%s278 + $0xc] sm:$0xf]
        %v291 = vld [vmem:[%s278 + $0x10] sm:$0xf]
        %v292 = vld [vmem:[%s278 + $0x14] sm:$0xf]
        %v293 = vld [vmem:[%s234] sm:$0xf]
        %v294 = vld [vmem:[%s234 + $0x4] sm:$0xf]
        %v295 = vld [vmem:[%s283] sm:$0xf]
        %v296 = vld [vmem:[%s283 + $0x4] sm:$0xf]
        %v297 = vld [vmem:[%s283 + $0x8] sm:$0xf]
        %v298 = vld [vmem:[%s283 + $0xc] sm:$0xf]
        %v299 = vld [vmem:[%s283 + $0x10] sm:$0xf]
        %v300 = vld [vmem:[%s283 + $0x14] sm:$0xf]
        %v301 = vld [vmem:[%s283 + $0x18] sm:$0xf]
        %v302 = vld [vmem:[%s283 + $0x1c] sm:$0xf]
        %v303 = vld [vmem:[%s283 + $0x20] sm:$0xf]
        %v304 = vld [vmem:[%s283 + $0x24] sm:$0xf]
        %v305 = vld [vmem:[%s283 + $0x28] sm:$0xf]
        %v306 = vld [vmem:[%s283 + $0x2c] sm:$0xf]
        %v307 = vld [vmem:[%s283 + $0x30] sm:$0xf]
        %v308 = vld [vmem:[%s283 + $0x34] sm:$0xf]
        %v309 = vld [vmem:[%s283 + $0x38] sm:$0xf]
        %v310 = vld [vmem:[%s283 + $0x3c] sm:$0xf]
        %v317 = vunpack.c.l.b16 %v287
        %v318 = vunpack.c.l.b16 %v288
        %v319 = vunpack.c.l.b16 %v289
        %v320 = vunpack.c.l.b16 %v290
        %v321 = vunpack.c.l.b16 %v291
        %v322 = vunpack.c.l.b16 %v292
        %v323 = vpack.c.b16 %v318, %v317
        %v324 = vpack.c.b16 %v320, %v319
        %v325 = vpack.c.b16 %v322, %v321
        %v328 = vunpack.c.l.b16 %v293
        %v329 = vunpack.c.l.b16 %v294
        %v330 = vpack.c.b16 %v329, %v328
        %vm332 = vcmask 130048
        %v334 = vsel %vm332, %v323, 0
        %v337 = vsel %vm332, %v324, 0
        %v340 = vsel %vm332, %v325, 0
        %342 = vmatprep.subr.bf16.mxu0 0
        %343 = vmatpush1.bf16.msra.mxu0 0
        %344 = vmatprep.subr.bf16.mxu0 0
        %345 = vmatpush1.bf16.msra.mxu0 0
        %346 = vmatprep.subr.bf16.mxu0 0
        %347 = vmatpush1.bf16.msra.mxu0 0
        %348 = vmatprep.subr.bf16.mxu0 0
        %349 = vmatpush1.bf16.msra.mxu0 0
        %350 = vmatprep.subr.bf16.mxu0 0
        %351 = vmatpush1.bf16.msra.mxu0 0
        %352 = vmatprep.subr.bf16.mxu0 0
        %353 = vmatpush1.bf16.msra.mxu0 0
        %354 = vmatprep.subr.bf16.mxu0 0
        %355 = vmatpush1.bf16.msra.mxu0 0
        %356 = vmatprep.subr.bf16.mxu0 0
        %357 = vmatpush1.bf16.msra.mxu0 %v330
        %358 = vmatprep.subr.bf16.mxu0 0
        %359 = vmatpush2.bf16.msra.mxu0 0
        %360 = vmatprep.subr.bf16.mxu0 0
        %361 = vmatpush2.bf16.msra.mxu0 0
        %362 = vmatprep.subr.bf16.mxu0 0
        %363 = vmatpush2.bf16.msra.mxu0 0
        %364 = vmatprep.subr.bf16.mxu0 0
        %365 = vmatpush2.bf16.msra.mxu0 0
        %366 = vmatprep.subr.bf16.mxu0 0
        %367 = vmatpush2.bf16.msra.mxu0 0
        %368 = vmatprep.subr.bf16.mxu0 0
        %369 = vmatpush2.bf16.msra.mxu0 0
        %370 = vmatprep.subr.bf16.mxu0 0
        %371 = vmatpush2.bf16.msra.mxu0 0
        %372 = vmatprep.subr.bf16.mxu0 0
        %373 = vmatpush2.bf16.msra.mxu0 0
        %374 = vmatprep.mubr.bf16.mxu0 0
        %375 = vmatmul.mubr.bf16.gmra.mxu0 %v334
        %v376 = vpop.f32.mrf.mxu0
        %v377 = vadd.f32 0.0, %v376
        %v378 = vpop.f32.mrf.mxu0
        %v379 = vpop.f32.mrf.mxu0
        %v380 = vadd.f32 0.0, %v379
        %v381 = vpop.f32.mrf.mxu0
        %382 = vmatprep.mubr.bf16.mxu0 0
        %383 = vmatmul.mubr.bf16.gmra.mxu0 %v337
        %v384 = vpop.f32.mrf.mxu0
        %v385 = vadd.f32 0.0, %v384
        %v386 = vpop.f32.mrf.mxu0
        %v387 = vpop.f32.mrf.mxu0
        %v388 = vadd.f32 0.0, %v387
        %v389 = vpop.f32.mrf.mxu0
        %390 = vmatprep.mubr.bf16.mxu0 0
        %391 = vmatmul.mubr.bf16.gmra.mxu0 %v340
        %v392 = vpop.f32.mrf.mxu0
        %v393 = vadd.f32 0.0, %v392
        %v394 = vpop.f32.mrf.mxu0
        %v395 = vpop.f32.mrf.mxu0
        %v396 = vadd.f32 0.0, %v395
        %v397 = vpop.f32.mrf.mxu0
        %398 = vdwg.mxu0
        %v399 = vpack.c.bf16 %v380, %v377
        %v400 = vpack.c.bf16 %v388, %v385
        %v401 = vpack.c.bf16 %v396, %v393
        %v418 = vunpack.c.l.b16 %v295
        %v419 = vunpack.c.l.b16 %v296
        %v420 = vunpack.c.l.b16 %v297
        %v421 = vunpack.c.l.b16 %v298
        %v422 = vunpack.c.l.b16 %v299
        %v423 = vunpack.c.l.b16 %v300
        %v424 = vunpack.c.l.b16 %v301
        %v425 = vunpack.c.l.b16 %v302
        %v426 = vunpack.c.l.b16 %v303
        %v427 = vunpack.c.l.b16 %v304
        %v428 = vunpack.c.l.b16 %v305
        %v429 = vunpack.c.l.b16 %v306
        %v430 = vunpack.c.l.b16 %v307
        %v431 = vunpack.c.l.b16 %v308
        %v432 = vunpack.c.l.b16 %v309
        %v433 = vunpack.c.l.b16 %v310
        %v434 = vpack.c.b16 %v419, %v418
        %v435 = vpack.c.b16 %v421, %v420
        %v436 = vpack.c.b16 %v423, %v422
        %v437 = vpack.c.b16 %v425, %v424
        %v438 = vpack.c.b16 %v427, %v426
        %v439 = vpack.c.b16 %v429, %v428
        %v440 = vpack.c.b16 %v431, %v430
        %v441 = vpack.c.b16 %v433, %v432
        %v443 = vsel %vm332, %v434, 0
        %v446 = vsel %vm332, %v435, 0
        %v449 = vsel %vm332, %v436, 0
        %v452 = vsel %vm332, %v437, 0
        %v455 = vsel %vm332, %v438, 0
        %v458 = vsel %vm332, %v439, 0
        %v461 = vsel %vm332, %v440, 0
        %v464 = vsel %vm332, %v441, 0
        %466 = vmatprep.subr.bf16.mxu0 0
        %467 = vmatpush1.bf16.msra.mxu0 0
        %468 = vmatprep.subr.bf16.mxu0 0
        %469 = vmatpush1.bf16.msra.mxu0 0
        %470 = vmatprep.subr.bf16.mxu0 0
        %471 = vmatpush1.bf16.msra.mxu0 0
        %472 = vmatprep.subr.bf16.mxu0 0
        %473 = vmatpush1.bf16.msra.mxu0 0
        %474 = vmatprep.subr.bf16.mxu0 0
        %475 = vmatpush1.bf16.msra.mxu0 0
        %476 = vmatprep.subr.bf16.mxu0 0
        %477 = vmatpush1.bf16.msra.mxu0 0
        %478 = vmatprep.subr.bf16.mxu0 0
        %479 = vmatpush1.bf16.msra.mxu0 0
        %480 = vmatprep.subr.bf16.mxu0 0
        %481 = vmatpush1.bf16.msra.mxu0 %v399
        %482 = vmatprep.subr.bf16.mxu0 0
        %483 = vmatpush2.bf16.msra.mxu0 0
        %484 = vmatprep.subr.bf16.mxu0 0
        %485 = vmatpush2.bf16.msra.mxu0 0
        %486 = vmatprep.subr.bf16.mxu0 0
        %487 = vmatpush2.bf16.msra.mxu0 0
        %488 = vmatprep.subr.bf16.mxu0 0
        %489 = vmatpush2.bf16.msra.mxu0 0
        %490 = vmatprep.subr.bf16.mxu0 0
        %491 = vmatpush2.bf16.msra.mxu0 0
        %492 = vmatprep.subr.bf16.mxu0 0
        %493 = vmatpush2.bf16.msra.mxu0 0
        %494 = vmatprep.subr.bf16.mxu0 0
        %495 = vmatpush2.bf16.msra.mxu0 0
        %496 = vmatprep.subr.bf16.mxu0 0
        %497 = vmatpush2.bf16.msra.mxu0 0
        %498 = vmatprep.mubr.bf16.mxu0 0
        %499 = vmatmul.mubr.bf16.gmra.mxu0 %v443
        %v500 = vpop.f32.mrf.mxu0
        %v501 = vadd.f32 0.0, %v500
        %v502 = vpop.f32.mrf.mxu0
        %v503 = vpop.f32.mrf.mxu0
        %v504 = vadd.f32 0.0, %v503
        %v505 = vpop.f32.mrf.mxu0
        %506 = vmatprep.mubr.bf16.mxu0 0
        %507 = vmatmul.mubr.bf16.gmra.mxu0 %v446
        %v508 = vpop.f32.mrf.mxu0
        %v509 = vadd.f32 0.0, %v508
        %v510 = vpop.f32.mrf.mxu0
        %v511 = vpop.f32.mrf.mxu0
        %v512 = vadd.f32 0.0, %v511
        %v513 = vpop.f32.mrf.mxu0
        %514 = vmatprep.mubr.bf16.mxu0 0
        %515 = vmatmul.mubr.bf16.gmra.mxu0 %v449
        %v516 = vpop.f32.mrf.mxu0
        %v517 = vadd.f32 0.0, %v516
        %v518 = vpop.f32.mrf.mxu0
        %v519 = vpop.f32.mrf.mxu0
        %v520 = vadd.f32 0.0, %v519
        %v521 = vpop.f32.mrf.mxu0
        %522 = vmatprep.mubr.bf16.mxu0 0
        %523 = vmatmul.mubr.bf16.gmra.mxu0 %v452
        %v524 = vpop.f32.mrf.mxu0
        %v525 = vadd.f32 0.0, %v524
        %v526 = vpop.f32.mrf.mxu0
        %v527 = vpop.f32.mrf.mxu0
        %v528 = vadd.f32 0.0, %v527
        %v529 = vpop.f32.mrf.mxu0
        %530 = vmatprep.mubr.bf16.mxu0 0
        %531 = vmatmul.mubr.bf16.gmra.mxu0 %v455
        %v532 = vpop.f32.mrf.mxu0
        %v533 = vadd.f32 0.0, %v532
        %v534 = vpop.f32.mrf.mxu0
        %v535 = vpop.f32.mrf.mxu0
        %v536 = vadd.f32 0.0, %v535
        %v537 = vpop.f32.mrf.mxu0
        %538 = vmatprep.mubr.bf16.mxu0 0
        %539 = vmatmul.mubr.bf16.gmra.mxu0 %v458
        %v540 = vpop.f32.mrf.mxu0
        %v541 = vadd.f32 0.0, %v540
        %v542 = vpop.f32.mrf.mxu0
        %v543 = vpop.f32.mrf.mxu0
        %v544 = vadd.f32 0.0, %v543
        %v545 = vpop.f32.mrf.mxu0
        %546 = vmatprep.mubr.bf16.mxu0 0
        %547 = vmatmul.mubr.bf16.gmra.mxu0 %v461
        %v548 = vpop.f32.mrf.mxu0
        %v549 = vadd.f32 0.0, %v548
        %v550 = vpop.f32.mrf.mxu0
        %v551 = vpop.f32.mrf.mxu0
        %v552 = vadd.f32 0.0, %v551
        %v553 = vpop.f32.mrf.mxu0
        %554 = vmatprep.mubr.bf16.mxu0 0
        %555 = vmatmul.mubr.bf16.gmra.mxu0 %v464
        %v556 = vpop.f32.mrf.mxu0
        %v557 = vadd.f32 0.0, %v556
        %v558 = vpop.f32.mrf.mxu0
        %v559 = vpop.f32.mrf.mxu0
        %v560 = vadd.f32 0.0, %v559
        %v561 = vpop.f32.mrf.mxu0
        %562 = vdwg.mxu0
        %563 = vmatprep.subr.bf16.mxu0 0
        %564 = vmatpush1.bf16.msra.mxu0 0
        %565 = vmatprep.subr.bf16.mxu0 0
        %566 = vmatpush1.bf16.msra.mxu0 0
        %567 = vmatprep.subr.bf16.mxu0 0
        %568 = vmatpush1.bf16.msra.mxu0 0
        %569 = vmatprep.subr.bf16.mxu0 0
        %570 = vmatpush1.bf16.msra.mxu0 0
        %571 = vmatprep.subr.bf16.mxu0 0
        %572 = vmatpush1.bf16.msra.mxu0 0
        %573 = vmatprep.subr.bf16.mxu0 0
        %574 = vmatpush1.bf16.msra.mxu0 0
        %575 = vmatprep.subr.bf16.mxu0 0
        %576 = vmatpush1.bf16.msra.mxu0 0
        %577 = vmatprep.subr.bf16.mxu0 0
        %578 = vmatpush1.bf16.msra.mxu0 %v400
        %579 = vmatprep.subr.bf16.mxu0 0
        %580 = vmatpush2.bf16.msra.mxu0 0
        %581 = vmatprep.subr.bf16.mxu0 0
        %582 = vmatpush2.bf16.msra.mxu0 0
        %583 = vmatprep.subr.bf16.mxu0 0
        %584 = vmatpush2.bf16.msra.mxu0 0
        %585 = vmatprep.subr.bf16.mxu0 0
        %586 = vmatpush2.bf16.msra.mxu0 0
        %587 = vmatprep.subr.bf16.mxu0 0
        %588 = vmatpush2.bf16.msra.mxu0 0
        %589 = vmatprep.subr.bf16.mxu0 0
        %590 = vmatpush2.bf16.msra.mxu0 0
        %591 = vmatprep.subr.bf16.mxu0 0
        %592 = vmatpush2.bf16.msra.mxu0 0
        %593 = vmatprep.subr.bf16.mxu0 0
        %594 = vmatpush2.bf16.msra.mxu0 0
        %595 = vmatprep.mubr.bf16.mxu0 0
        %596 = vmatmul.mubr.bf16.gmra.mxu0 %v443
        %v597 = vpop.f32.mrf.mxu0
        %v598 = vadd.f32 0.0, %v597
        %v599 = vpop.f32.mrf.mxu0
        %v600 = vpop.f32.mrf.mxu0
        %v601 = vadd.f32 0.0, %v600
        %v602 = vpop.f32.mrf.mxu0
        %603 = vmatprep.mubr.bf16.mxu0 0
        %604 = vmatmul.mubr.bf16.gmra.mxu0 %v446
        %v605 = vpop.f32.mrf.mxu0
        %v606 = vadd.f32 0.0, %v605
        %v607 = vpop.f32.mrf.mxu0
        %v608 = vpop.f32.mrf.mxu0
        %v609 = vadd.f32 0.0, %v608
        %v610 = vpop.f32.mrf.mxu0
        %611 = vmatprep.mubr.bf16.mxu0 0
        %612 = vmatmul.mubr.bf16.gmra.mxu0 %v449
        %v613 = vpop.f32.mrf.mxu0
        %v614 = vadd.f32 0.0, %v613
        %v615 = vpop.f32.mrf.mxu0
        %v616 = vpop.f32.mrf.mxu0
        %v617 = vadd.f32 0.0, %v616
        %v618 = vpop.f32.mrf.mxu0
        %619 = vmatprep.mubr.bf16.mxu0 0
        %620 = vmatmul.mubr.bf16.gmra.mxu0 %v452
        %v621 = vpop.f32.mrf.mxu0
        %v622 = vadd.f32 0.0, %v621
        %v623 = vpop.f32.mrf.mxu0
        %v624 = vpop.f32.mrf.mxu0
        %v625 = vadd.f32 0.0, %v624
        %v626 = vpop.f32.mrf.mxu0
        %627 = vmatprep.mubr.bf16.mxu0 0
        %628 = vmatmul.mubr.bf16.gmra.mxu0 %v455
        %v629 = vpop.f32.mrf.mxu0
        %v630 = vadd.f32 0.0, %v629
        %v631 = vpop.f32.mrf.mxu0
        %v632 = vpop.f32.mrf.mxu0
        %v633 = vadd.f32 0.0, %v632
        %v634 = vpop.f32.mrf.mxu0
        %635 = vmatprep.mubr.bf16.mxu0 0
        %636 = vmatmul.mubr.bf16.gmra.mxu0 %v458
        %v637 = vpop.f32.mrf.mxu0
        %v638 = vadd.f32 0.0, %v637
        %v639 = vpop.f32.mrf.mxu0
        %v640 = vpop.f32.mrf.mxu0
        %v641 = vadd.f32 0.0, %v640
        %v642 = vpop.f32.mrf.mxu0
        %643 = vmatprep.mubr.bf16.mxu0 0
        %644 = vmatmul.mubr.bf16.gmra.mxu0 %v461
        %v645 = vpop.f32.mrf.mxu0
        %v646 = vadd.f32 0.0, %v645
        %v647 = vpop.f32.mrf.mxu0
        %v648 = vpop.f32.mrf.mxu0
        %v649 = vadd.f32 0.0, %v648
        %v650 = vpop.f32.mrf.mxu0
        %651 = vmatprep.mubr.bf16.mxu0 0
        %652 = vmatmul.mubr.bf16.gmra.mxu0 %v464
        %v653 = vpop.f32.mrf.mxu0
        %v654 = vadd.f32 0.0, %v653
        %v655 = vpop.f32.mrf.mxu0
        %v656 = vpop.f32.mrf.mxu0
        %v657 = vadd.f32 0.0, %v656
        %v658 = vpop.f32.mrf.mxu0
        %659 = vdwg.mxu0
        %660 = vmatprep.subr.bf16.mxu0 0
        %661 = vmatpush1.bf16.msra.mxu0 0
        %662 = vmatprep.subr.bf16.mxu0 0
        %663 = vmatpush1.bf16.msra.mxu0 0
        %664 = vmatprep.subr.bf16.mxu0 0
        %665 = vmatpush1.bf16.msra.mxu0 0
        %666 = vmatprep.subr.bf16.mxu0 0
        %667 = vmatpush1.bf16.msra.mxu0 0
        %668 = vmatprep.subr.bf16.mxu0 0
        %669 = vmatpush1.bf16.msra.mxu0 0
        %670 = vmatprep.subr.bf16.mxu0 0
        %671 = vmatpush1.bf16.msra.mxu0 0
        %672 = vmatprep.subr.bf16.mxu0 0
        %673 = vmatpush1.bf16.msra.mxu0 0
        %674 = vmatprep.subr.bf16.mxu0 0
        %675 = vmatpush1.bf16.msra.mxu0 %v401
        %676 = vmatprep.subr.bf16.mxu0 0
        %677 = vmatpush2.bf16.msra.mxu0 0
        %678 = vmatprep.subr.bf16.mxu0 0
        %679 = vmatpush2.bf16.msra.mxu0 0
        %680 = vmatprep.subr.bf16.mxu0 0
        %681 = vmatpush2.bf16.msra.mxu0 0
        %682 = vmatprep.subr.bf16.mxu0 0
        %683 = vmatpush2.bf16.msra.mxu0 0
        %684 = vmatprep.subr.bf16.mxu0 0
        %685 = vmatpush2.bf16.msra.mxu0 0
        %686 = vmatprep.subr.bf16.mxu0 0
        %687 = vmatpush2.bf16.msra.mxu0 0
        %688 = vmatprep.subr.bf16.mxu0 0
        %689 = vmatpush2.bf16.msra.mxu0 0
        %690 = vmatprep.subr.bf16.mxu0 0
        %691 = vmatpush2.bf16.msra.mxu0 0
        %692 = vmatprep.mubr.bf16.mxu0 0
        %693 = vmatmul.mubr.bf16.gmra.mxu0 %v443
        %v694 = vpop.f32.mrf.mxu0
        %v695 = vadd.f32 0.0, %v694
        %v696 = vpop.f32.mrf.mxu0
        %v697 = vpop.f32.mrf.mxu0
        %v698 = vadd.f32 0.0, %v697
        %v699 = vpop.f32.mrf.mxu0
        %700 = vmatprep.mubr.bf16.mxu0 0
        %701 = vmatmul.mubr.bf16.gmra.mxu0 %v446
        %v702 = vpop.f32.mrf.mxu0
        %v703 = vadd.f32 0.0, %v702
        %v704 = vpop.f32.mrf.mxu0
        %v705 = vpop.f32.mrf.mxu0
        %v706 = vadd.f32 0.0, %v705
        %v707 = vpop.f32.mrf.mxu0
        %708 = vmatprep.mubr.bf16.mxu0 0
        %709 = vmatmul.mubr.bf16.gmra.mxu0 %v449
        %v710 = vpop.f32.mrf.mxu0
        %v711 = vadd.f32 0.0, %v710
        %v712 = vpop.f32.mrf.mxu0
        %v713 = vpop.f32.mrf.mxu0
        %v714 = vadd.f32 0.0, %v713
        %v715 = vpop.f32.mrf.mxu0
        %716 = vmatprep.mubr.bf16.mxu0 0
        %717 = vmatmul.mubr.bf16.gmra.mxu0 %v452
        %v718 = vpop.f32.mrf.mxu0
        %v719 = vadd.f32 0.0, %v718
        %v720 = vpop.f32.mrf.mxu0
        %v721 = vpop.f32.mrf.mxu0
        %v722 = vadd.f32 0.0, %v721
        %v723 = vpop.f32.mrf.mxu0
        %724 = vmatprep.mubr.bf16.mxu0 0
        %725 = vmatmul.mubr.bf16.gmra.mxu0 %v455
        %v726 = vpop.f32.mrf.mxu0
        %v727 = vadd.f32 0.0, %v726
        %v728 = vpop.f32.mrf.mxu0
        %v729 = vpop.f32.mrf.mxu0
        %v730 = vadd.f32 0.0, %v729
        %v731 = vpop.f32.mrf.mxu0
        %732 = vmatprep.mubr.bf16.mxu0 0
        %733 = vmatmul.mubr.bf16.gmra.mxu0 %v458
        %v734 = vpop.f32.mrf.mxu0
        %v735 = vadd.f32 0.0, %v734
        %v736 = vpop.f32.mrf.mxu0
        %v737 = vpop.f32.mrf.mxu0
        %v738 = vadd.f32 0.0, %v737
        %v739 = vpop.f32.mrf.mxu0
        %740 = vmatprep.mubr.bf16.mxu0 0
        %741 = vmatmul.mubr.bf16.gmra.mxu0 %v461
        %v742 = vpop.f32.mrf.mxu0
        %v743 = vadd.f32 0.0, %v742
        %v744 = vpop.f32.mrf.mxu0
        %v745 = vpop.f32.mrf.mxu0
        %v746 = vadd.f32 0.0, %v745
        %v747 = vpop.f32.mrf.mxu0
        %748 = vmatprep.mubr.bf16.mxu0 0
        %749 = vmatmul.mubr.bf16.gmra.mxu0 %v464
        %v750 = vpop.f32.mrf.mxu0
        %v751 = vadd.f32 0.0, %v750
        %v752 = vpop.f32.mrf.mxu0
        %v753 = vpop.f32.mrf.mxu0
        %v754 = vadd.f32 0.0, %v753
        %v755 = vpop.f32.mrf.mxu0
        %756 = vdwg.mxu0
        %s757 = sld [smem:[#allocation6 + %s27]]
        %p758 = scmp.ne.s32.totalorder %s757, 0
        // Predicated region
        $region45: #{tpu_custom_call.1} parent=35 // pred_check
          %p759 = pneg %p758
        $region46: #{tpu_custom_call.1} parent=35 // pred_check_branch
          %761 = sbr.rel (%p759) target = $region48
        $region47: #{tpu_custom_call.1} parent=35 // pred_region
          %v762 = vmul.f32 %v501, 0.2989
          %v763 = vmul.f32 %v504, 0.2989
          %v764 = vmul.f32 %v509, 0.2989
          %v765 = vmul.f32 %v512, 0.2989
          %v766 = vmul.f32 %v517, 0.2989
          %v767 = vmul.f32 %v520, 0.2989
          %v768 = vmul.f32 %v525, 0.2989
          %v769 = vmul.f32 %v528, 0.2989
          %v770 = vmul.f32 %v533, 0.2989
          %v771 = vmul.f32 %v536, 0.2989
          %v772 = vmul.f32 %v541, 0.2989
          %v773 = vmul.f32 %v544, 0.2989
          %v774 = vmul.f32 %v549, 0.2989
          %v775 = vmul.f32 %v552, 0.2989
          %v776 = vmul.f32 %v557, 0.2989
          %v777 = vmul.f32 %v560, 0.2989
          %v778 = vmul.f32 %v598, 0.587
          %v779 = vmul.f32 %v601, 0.587
          %v780 = vmul.f32 %v606, 0.587
          %v781 = vmul.f32 %v609, 0.587
          %v782 = vmul.f32 %v614, 0.587
          %v783 = vmul.f32 %v617, 0.587
          %v784 = vmul.f32 %v622, 0.587
          %v785 = vmul.f32 %v625, 0.587
          %v786 = vmul.f32 %v630, 0.587
          %v787 = vmul.f32 %v633, 0.587
          %v788 = vmul.f32 %v638, 0.587
          %v789 = vmul.f32 %v641, 0.587
          %v790 = vmul.f32 %v646, 0.587
          %v791 = vmul.f32 %v649, 0.587
          %v792 = vmul.f32 %v654, 0.587
          %v793 = vmul.f32 %v657, 0.587
          %v794 = vadd.f32 %v762, %v778
          %v795 = vadd.f32 %v763, %v779
          %v796 = vadd.f32 %v764, %v780
          %v797 = vadd.f32 %v765, %v781
          %v798 = vadd.f32 %v766, %v782
          %v799 = vadd.f32 %v767, %v783
          %v800 = vadd.f32 %v768, %v784
          %v801 = vadd.f32 %v769, %v785
          %v802 = vadd.f32 %v770, %v786
          %v803 = vadd.f32 %v771, %v787
          %v804 = vadd.f32 %v772, %v788
          %v805 = vadd.f32 %v773, %v789
          %v806 = vadd.f32 %v774, %v790
          %v807 = vadd.f32 %v775, %v791
          %v808 = vadd.f32 %v776, %v792
          %v809 = vadd.f32 %v777, %v793
          %v810 = vmul.f32 %v695, 0.114
          %v811 = vmul.f32 %v698, 0.114
          %v812 = vmul.f32 %v703, 0.114
          %v813 = vmul.f32 %v706, 0.114
          %v814 = vmul.f32 %v711, 0.114
          %v815 = vmul.f32 %v714, 0.114
          %v816 = vmul.f32 %v719, 0.114
          %v817 = vmul.f32 %v722, 0.114
          %v818 = vmul.f32 %v727, 0.114
          %v819 = vmul.f32 %v730, 0.114
          %v820 = vmul.f32 %v735, 0.114
          %v821 = vmul.f32 %v738, 0.114
          %v822 = vmul.f32 %v743, 0.114
          %v823 = vmul.f32 %v746, 0.114
          %v824 = vmul.f32 %v751, 0.114
          %v825 = vmul.f32 %v754, 0.114
          %v826 = vadd.f32 %v794, %v810
          %v827 = vadd.f32 %v795, %v811
          %v828 = vadd.f32 %v796, %v812
          %v829 = vadd.f32 %v797, %v813
          %v830 = vadd.f32 %v798, %v814
          %v831 = vadd.f32 %v799, %v815
          %v832 = vadd.f32 %v800, %v816
          %v833 = vadd.f32 %v801, %v817
          %v834 = vadd.f32 %v802, %v818
          %v835 = vadd.f32 %v803, %v819
          %v836 = vadd.f32 %v804, %v820
          %v837 = vadd.f32 %v805, %v821
          %v838 = vadd.f32 %v806, %v822
          %v839 = vadd.f32 %v807, %v823
          %v840 = vadd.f32 %v808, %v824
          %v841 = vadd.f32 %v809, %v825
          %842 = vst [vmem:[%s273] sm:$0xff] %v826
          %843 = vst [vmem:[%s273 + $0x8] sm:$0xff] %v827
          %844 = vst [vmem:[%s273 + $0x10] sm:$0xff] %v828
          %845 = vst [vmem:[%s273 + $0x18] sm:$0xff] %v829
          %846 = vst [vmem:[%s273 + $0x20] sm:$0xff] %v830
          %847 = vst [vmem:[%s273 + $0x28] sm:$0xff] %v831
          %848 = vst [vmem:[%s273 + $0x30] sm:$0xff] %v832
          %849 = vst [vmem:[%s273 + $0x38] sm:$0xff] %v833
          %850 = vst [vmem:[%s273 + $0x40] sm:$0xff] %v834
          %851 = vst [vmem:[%s273 + $0x48] sm:$0xff] %v835
          %852 = vst [vmem:[%s273 + $0x50] sm:$0xff] %v836
          %853 = vst [vmem:[%s273 + $0x58] sm:$0xff] %v837
          %854 = vst [vmem:[%s273 + $0x60] sm:$0xff] %v838
          %855 = vst [vmem:[%s273 + $0x68] sm:$0xff] %v839
          %856 = vst [vmem:[%s273 + $0x70] sm:$0xff] %v840
          %857 = vst [vmem:[%s273 + $0x78] sm:$0xff] %v841
          %s858 = scalar_lea.vmem %s273, 128 [#allocation7]
          %859 = vst [vmem:[%s858] sm:$0xff] %v826
          %860 = vst [vmem:[%s858 + $0x8] sm:$0xff] %v827
          %861 = vst [vmem:[%s858 + $0x10] sm:$0xff] %v828
          %862 = vst [vmem:[%s858 + $0x18] sm:$0xff] %v829
          %863 = vst [vmem:[%s858 + $0x20] sm:$0xff] %v830
          %864 = vst [vmem:[%s858 + $0x28] sm:$0xff] %v831
          %865 = vst [vmem:[%s858 + $0x30] sm:$0xff] %v832
          %866 = vst [vmem:[%s858 + $0x38] sm:$0xff] %v833
          %867 = vst [vmem:[%s858 + $0x40] sm:$0xff] %v834
          %868 = vst [vmem:[%s858 + $0x48] sm:$0xff] %v835
          %869 = vst [vmem:[%s858 + $0x50] sm:$0xff] %v836
          %870 = vst [vmem:[%s858 + $0x58] sm:$0xff] %v837
          %871 = vst [vmem:[%s858 + $0x60] sm:$0xff] %v838
          %872 = vst [vmem:[%s858 + $0x68] sm:$0xff] %v839
          %873 = vst [vmem:[%s858 + $0x70] sm:$0xff] %v840
          %874 = vst [vmem:[%s858 + $0x78] sm:$0xff] %v841
          %s875 = scalar_lea.vmem %s273, 256 [#allocation7]
          %876 = vst [vmem:[%s875] sm:$0xff] %v826
          %877 = vst [vmem:[%s875 + $0x8] sm:$0xff] %v827
          %878 = vst [vmem:[%s875 + $0x10] sm:$0xff] %v828
          %879 = vst [vmem:[%s875 + $0x18] sm:$0xff] %v829
          %880 = vst [vmem:[%s875 + $0x20] sm:$0xff] %v830
          %881 = vst [vmem:[%s875 + $0x28] sm:$0xff] %v831
          %882 = vst [vmem:[%s875 + $0x30] sm:$0xff] %v832
          %883 = vst [vmem:[%s875 + $0x38] sm:$0xff] %v833
          %884 = vst [vmem:[%s875 + $0x40] sm:$0xff] %v834
          %885 = vst [vmem:[%s875 + $0x48] sm:$0xff] %v835
          %886 = vst [vmem:[%s875 + $0x50] sm:$0xff] %v836
          %887 = vst [vmem:[%s875 + $0x58] sm:$0xff] %v837
          %888 = vst [vmem:[%s875 + $0x60] sm:$0xff] %v838
          %889 = vst [vmem:[%s875 + $0x68] sm:$0xff] %v839
          %890 = vst [vmem:[%s875 + $0x70] sm:$0xff] %v840
          %891 = vst [vmem:[%s875 + $0x78] sm:$0xff] %v841
        $region48: #{tpu_custom_call.1} parent=35 // pred_fallthru
          _
        %p892 = scmp.eq.s32.totalorder %s757, 0
        // Predicated region
        $region49: #{tpu_custom_call.1} parent=35 // pred_check
          %p893 = pneg %p892
        $region50: #{tpu_custom_call.1} parent=35 // pred_check_branch
          %895 = sbr.rel (%p893) target = $region52
        $region51: #{tpu_custom_call.1} parent=35 // pred_region
          %896 = vst [vmem:[%s273] sm:$0xff] %v501
          %897 = vst [vmem:[%s273 + $0x8] sm:$0xff] %v504
          %898 = vst [vmem:[%s273 + $0x10] sm:$0xff] %v509
          %899 = vst [vmem:[%s273 + $0x18] sm:$0xff] %v512
          %900 = vst [vmem:[%s273 + $0x20] sm:$0xff] %v517
          %901 = vst [vmem:[%s273 + $0x28] sm:$0xff] %v520
          %902 = vst [vmem:[%s273 + $0x30] sm:$0xff] %v525
          %903 = vst [vmem:[%s273 + $0x38] sm:$0xff] %v528
          %904 = vst [vmem:[%s273 + $0x40] sm:$0xff] %v533
          %905 = vst [vmem:[%s273 + $0x48] sm:$0xff] %v536
          %906 = vst [vmem:[%s273 + $0x50] sm:$0xff] %v541
          %907 = vst [vmem:[%s273 + $0x58] sm:$0xff] %v544
          %908 = vst [vmem:[%s273 + $0x60] sm:$0xff] %v549
          %909 = vst [vmem:[%s273 + $0x68] sm:$0xff] %v552
          %910 = vst [vmem:[%s273 + $0x70] sm:$0xff] %v557
          %911 = vst [vmem:[%s273 + $0x78] sm:$0xff] %v560
          %s912 = scalar_lea.vmem %s273, 128 [#allocation7]
          %913 = vst [vmem:[%s912] sm:$0xff] %v598
          %914 = vst [vmem:[%s912 + $0x8] sm:$0xff] %v601
          %915 = vst [vmem:[%s912 + $0x10] sm:$0xff] %v606
          %916 = vst [vmem:[%s912 + $0x18] sm:$0xff] %v609
          %917 = vst [vmem:[%s912 + $0x20] sm:$0xff] %v614
          %918 = vst [vmem:[%s912 + $0x28] sm:$0xff] %v617
          %919 = vst [vmem:[%s912 + $0x30] sm:$0xff] %v622
          %920 = vst [vmem:[%s912 + $0x38] sm:$0xff] %v625
          %921 = vst [vmem:[%s912 + $0x40] sm:$0xff] %v630
          %922 = vst [vmem:[%s912 + $0x48] sm:$0xff] %v633
          %923 = vst [vmem:[%s912 + $0x50] sm:$0xff] %v638
          %924 = vst [vmem:[%s912 + $0x58] sm:$0xff] %v641
          %925 = vst [vmem:[%s912 + $0x60] sm:$0xff] %v646
          %926 = vst [vmem:[%s912 + $0x68] sm:$0xff] %v649
          %927 = vst [vmem:[%s912 + $0x70] sm:$0xff] %v654
          %928 = vst [vmem:[%s912 + $0x78] sm:$0xff] %v657
          %s929 = scalar_lea.vmem %s273, 256 [#allocation7]
          %930 = vst [vmem:[%s929] sm:$0xff] %v695
          %931 = vst [vmem:[%s929 + $0x8] sm:$0xff] %v698
          %932 = vst [vmem:[%s929 + $0x10] sm:$0xff] %v703
          %933 = vst [vmem:[%s929 + $0x18] sm:$0xff] %v706
          %934 = vst [vmem:[%s929 + $0x20] sm:$0xff] %v711
          %935 = vst [vmem:[%s929 + $0x28] sm:$0xff] %v714
          %936 = vst [vmem:[%s929 + $0x30] sm:$0xff] %v719
          %937 = vst [vmem:[%s929 + $0x38] sm:$0xff] %v722
          %938 = vst [vmem:[%s929 + $0x40] sm:$0xff] %v727
          %939 = vst [vmem:[%s929 + $0x48] sm:$0xff] %v730
          %940 = vst [vmem:[%s929 + $0x50] sm:$0xff] %v735
          %941 = vst [vmem:[%s929 + $0x58] sm:$0xff] %v738
          %942 = vst [vmem:[%s929 + $0x60] sm:$0xff] %v743
          %943 = vst [vmem:[%s929 + $0x68] sm:$0xff] %v746
          %944 = vst [vmem:[%s929 + $0x70] sm:$0xff] %v751
          %945 = vst [vmem:[%s929 + $0x78] sm:$0xff] %v754
        $region52: #{tpu_custom_call.1} parent=35 // pred_fallthru
          _
        %s946 = sand.u32 %s145, 1
        %s947 = scalar_lea.sflag [#allocation4], %s946
        %s948 = sand.u32 %s145, 1
        %s949 = smul.addr %s948, 384
        %s950 = scalar_lea.vmem [#allocation7], %s949
        // Predicated region
        $region53: #{tpu_custom_call.1} parent=35 // pred_check
          %p951 = pneg %p155
        $region54: #{tpu_custom_call.1} parent=35 // pred_check_branch
          %953 = sbr.rel (%p951) target = $region56
        $region55: #{tpu_custom_call.1} parent=35 // pred_region
          %s954 = smul.u32 %s27, 2
          %s955 = sadd.s32 %s954, %s26
          %s957 = ssub.s32 6144, 6144
          %958 = vsyncadd %s947, %s957
          %s959 = smul.addr %s955, 48
          %s960 = smul.addr %s959, 128
          %s961 = scalar_lea.hbm %s4, %s960
          %s962 = sshll.u32 %s950, 4
          %s963 = int_to_ptr.vmem [resolvable:$true] %s962
          %968 = dma.vmem_to_hbm [thread:$0]  %s963, 6144, %s961, %s947, 128, 128, 8
        $region56: #{tpu_custom_call.1} parent=35 // pred_fallthru
          _
      $region36: #{tpu_custom_call.1} parent=5 // pred_fallthru
        _
      %p969 = scmp.le.s32.totalorder 2, %s17
      // Predicated region
      $region57: #{tpu_custom_call.1} parent=5 // pred_check
        %p970 = pneg %p969
      $region58: #{tpu_custom_call.1} parent=5 // pred_check_branch
        %972 = sbr.rel (%p970) target = $region60
      $region59: #{tpu_custom_call.1} parent=5 // pred_region
        %s973 = ssub.s32 %s17, 2
        // Predicated region
        $region61: #{tpu_custom_call.1} parent=59 // pred_check
          %p974 = pneg %p161
        $region62: #{tpu_custom_call.1} parent=59 // pred_check_branch
          %976 = sbr.rel (%p974) target = $region64
        $region63: #{tpu_custom_call.1} parent=59 // pred_region
          %s977 = sand.u32 %s146, 1
          %s978 = scalar_lea.sflag [#allocation4], %s977
          %s979 = sand.u32 %s146, 1
          %s980 = smul.addr %s979, 384
          %s981 = scalar_lea.vmem [#allocation7], %s980
          %982 = dma.done %s978, 6144
        $region64: #{tpu_custom_call.1} parent=59 // pred_fallthru
          _
      $region60: #{tpu_custom_call.1} parent=5 // pred_fallthru
        _
    $region6: #{tpu_custom_call.1} parent=1 // loop_footer
      %s21 = sadd.s32 1, %s17
    $region7: #{tpu_custom_call.1} parent=1 // loop_footer_branch
      %16 = sbr.rel target = $region3
    $region8: #{tpu_custom_call.1} parent=1 // loop_exit
      _
    %983 = vsyncpa [#allocation3], 1
    %s984 = scalar_lea.sflag [#allocation3], 1
    %985 = vsyncpa %s984, 1
    %986 = vsyncpa [#allocation4], 1
    %s987 = scalar_lea.sflag [#allocation4], 1
    %988 = vsyncpa %s987, 1
    %989 = vsyncpa [#allocation5], 1
    %s990 = scalar_lea.sflag [#allocation5], 1
    %991 = vsyncpa %s990, 1

</llo_original>
